<compile_context>
chip_gen: v5e
topology: v5e:2x2
jax: 0.10.0
libtpu: 0.0.40
codegen_flags: <defaults>
</compile_context>

<pallas_src>
import functools

import jax
import jax.numpy as jnp
import numpy as np
from jax.experimental import pallas as pl
from jax.experimental.pallas import tpu as pltpu

BN_EPS = 1e-5


def _denoise_kernel(p_ref, a_ref, m_ref, x_ref, o_ref, *, W):
    # p_ref : VMEM (11, CB, 1)  rows 0..8 = 3x3 taps (ky*3+kx), 9 = gamma, 10 = beta
    # a_ref : SMEM (1,)         sigmoid(alpha)
    # m_ref : VMEM (4, 1, HW)   float masks: [left-valid, right-valid, top-valid, bot-valid]
    # x_ref : VMEM (N, CB, HW)  input channels of this block, spatially flattened
    # o_ref : VMEM (N, CB, HW)
    N, CB, HW = x_ref.shape

    x = x_ref[...]                    # single load of the input block
    p = p_ref[...]                    # (11, CB, 1) -- all per-channel params, hoisted
    m = m_ref[...]                    # (4, 1, HW)  -- precomputed validity masks
    m_l, m_r, m_t, m_b = m[0], m[1], m[2], m[3]          # each (1, HW)

    # ---- depthwise 3x3 conv (padding=1) via lane rolls --------------------
    # Horizontal neighbours: value at (h, w-1) / (h, w+1); the wrap across a
    # row boundary of the flattened image is zeroed by the column masks.
    x_l = m_l * pltpu.roll(x, shift=1, axis=2)            # x[i-1], 0 where w == 0
    x_r = m_r * pltpu.roll(x, shift=HW - 1, axis=2)       # x[i+1], 0 where w == W-1

    # Per-row weighted combinations; (CB,1) weights broadcast along lanes.
    top = p[0] * x_l + p[1] * x + p[2] * x_r              # ky = 0 (dy = -1)
    mid = p[3] * x_l + p[4] * x + p[5] * x_r              # ky = 1
    bot = p[6] * x_l + p[7] * x + p[8] * x_r              # ky = 2 (dy = +1)

    # Vertical taps: one +-W lane roll per off-centre row; the wrapped rows
    # (h == 0 for the top tap, h == H-1 for the bottom tap) are zeroed.
    # (conv bias omitted: a per-channel constant cancels exactly under the
    #  train-mode BatchNorm mean subtraction.)
    acc = (mid
           + m_t * pltpu.roll(top, shift=W, axis=2)       # top[i - W]
           + m_b * pltpu.roll(bot, shift=HW - W, axis=2)) # bot[i + W]

    # ---- BatchNorm2d (train-mode stats) fused with the alpha blend --------
    inv_cnt = 1.0 / float(N * HW)
    mean = jnp.sum(jnp.sum(acc, axis=0, keepdims=True),
                   axis=2, keepdims=True) * inv_cnt       # (1, CB, 1)
    centered = acc - mean
    var = jnp.sum(jnp.sum(centered * centered, axis=0, keepdims=True),
                  axis=2, keepdims=True) * inv_cnt        # biased variance, two-pass
    inv_std = jax.lax.rsqrt(var + BN_EPS)                 # EUP

    a = a_ref[0]
    scale = (1.0 - a) * p[9] * inv_std                    # (1, CB, 1)
    o_ref[...] = a * x + scale * centered + (1.0 - a) * p[10]   # lane-dense store


def _pick_channel_block(C, N, HW, *, vmem_budget_bytes=40 * 1024 * 1024):
    """Channel block size.

    Legal sublane blocks are multiples of 8 (or the full C).  Prefer the
    largest multiple-of-8 divisor of C that (a) keeps the live VMEM footprint
    (~2x input block + 2x output block + temps ~= 5 blocks) under a v7x-safe
    budget and (b) yields >= 3 grid steps so BlockSpec double-buffering
    overlaps DMA with compute and v7x's second TensorCore gets work.
    """
    legal = [d for d in range(8, C + 1, 8) if C % d == 0]
    if not legal:
        # No multiple-of-8 divisor (e.g. C=4): single whole-C block, 1 grid step
        # (correct, just no pipelining / second-core parallelism).
        return C

    def fits(cb):
        return 5 * N * cb * HW * 4 <= vmem_budget_bytes

    pipelined = [cb for cb in legal if (C // cb) >= 3 and fits(cb)]
    if pipelined:
        return max(pipelined)
    fitting = [cb for cb in legal if fits(cb)]
    if fitting:
        return max(fitting)
    # TODO(synk): for huge N*H*W even cb=8 overflows the budget; a spatial/N
    # grid axis with accumulator-scratch BN stats would be needed there.
    return min(legal)


def denoising_layer(x, conv_w, conv_b, bn_gamma, bn_beta, alpha):
    """x: (N,C,H,W) f32; conv_w: (C,1,3,3); conv_b/bn_gamma/bn_beta: (C,); alpha scalar."""
    del conv_b  # exactly cancelled by train-mode BatchNorm (mean subtraction)
    N, C, H, W = x.shape
    HW = H * W
    x_flat = x.astype(jnp.float32).reshape(N, C, HW)       # free (contiguous) re-view

    # Pack 9 taps + gamma + beta per channel as (11, C, 1) sublane vectors.
    w9 = conv_w.reshape(C, 9).astype(jnp.float32)
    params = jnp.concatenate(
        [w9,
         bn_gamma.reshape(C, 1).astype(jnp.float32),
         bn_beta.reshape(C, 1).astype(jnp.float32)], axis=1)          # (C, 11)
    params = jnp.transpose(params, (1, 0))[:, :, None]                # (11, C, 1)
    a_sig = jax.nn.sigmoid(jnp.asarray(alpha, jnp.float32)).reshape(1)

    # Precomputed validity masks for the roll-based taps (tiny constant input).
    idx = np.arange(HW)
    col = idx % W
    masks = np.stack([col > 0,                 # dx = -1 valid
                      col < (W - 1),           # dx = +1 valid
                      idx >= W,                # dy = -1 valid (h >= 1)
                      idx < (H - 1) * W],      # dy = +1 valid (h <= H-2)
                     ).astype(np.float32)
    masks = jnp.asarray(masks[:, None, :])                            # (4, 1, HW)

    cb = _pick_channel_block(C, N, HW)
    grid = (C // cb,)
    block_bytes = N * cb * HW * 4
    vmem_limit = int(min(100 * 1024 * 1024, max(32 * 1024 * 1024, 6 * block_bytes)))

    kernel = functools.partial(_denoise_kernel, W=W)
    out_flat = pl.pallas_call(
        kernel,
        out_shape=jax.ShapeDtypeStruct((N, C, HW), jnp.float32),
        grid=grid,
        in_specs=[
            pl.BlockSpec((11, cb, 1), lambda i: (0, i, 0)),           # per-channel params
            pl.BlockSpec(memory_space=pltpu.MemorySpace.SMEM),        # sigmoid(alpha)
            pl.BlockSpec((4, 1, HW), lambda i: (0, 0, 0)),            # dx/dy masks (broadcast)
            pl.BlockSpec((N, cb, HW), lambda i: (0, i, 0)),           # x (single HBM read)
        ],
        out_specs=pl.BlockSpec((N, cb, HW), lambda i: (0, i, 0)),
        compiler_params=pltpu.CompilerParams(
            dimension_semantics=("parallel",),
            vmem_limit_bytes=vmem_limit,
        ),
    )(params, a_sig, masks, x_flat)
    return out_flat.reshape(N, C, H, W)


def denoising_layer_ref(x, conv_w, conv_b, bn_gamma, bn_beta, alpha):
    """Pure-JAX reference mirroring the PyTorch forward (train-mode BN)."""
    C = x.shape[1]
    conv = jax.lax.conv_general_dilated(
        x, conv_w, window_strides=(1, 1), padding=((1, 1), (1, 1)),
        dimension_numbers=("NCHW", "OIHW", "NCHW"), feature_group_count=C,
        precision=jax.lax.Precision.HIGHEST)
    conv = conv + conv_b[None, :, None, None]
    mean = jnp.mean(conv, axis=(0, 2, 3), keepdims=True)
    var = jnp.mean((conv - mean) ** 2, axis=(0, 2, 3), keepdims=True)
    dn = (conv - mean) * jax.lax.rsqrt(var + BN_EPS)
    dn = dn * bn_gamma[None, :, None, None] + bn_beta[None, :, None, None]
    a = jax.nn.sigmoid(alpha)
    return a * x + (1.0 - a) * dn


if __name__ == "__main__":
    N, C, H, W = 2, 4, 16, 16

    key = jax.random.PRNGKey(0)
    kx, kw, kb, kg, kbt = jax.random.split(key, 5)

    x = jax.random.normal(kx, (N, C, H, W), dtype=jnp.float32)
    conv_w = 0.1 * jax.random.normal(kw, (C, 1, 3, 3), dtype=jnp.float32)
    conv_b = 0.1 * jax.random.normal(kb, (C,), dtype=jnp.float32)
    bn_gamma = 1.0 + 0.1 * jax.random.normal(kg, (C,), dtype=jnp.float32)
    bn_beta = 0.1 * jax.random.normal(kbt, (C,), dtype=jnp.float32)
    alpha = jnp.float32(0.5)   # nn.Parameter(torch.tensor(0.5))

    out = denoising_layer(x, conv_w, conv_b, bn_gamma, bn_beta, alpha)
    out = jax.block_until_ready(out)

    ref = denoising_layer_ref(x, conv_w, conv_b, bn_gamma, bn_beta, alpha)
    np.testing.assert_allclose(np.asarray(out), np.asarray(ref), rtol=1e-4, atol=1e-4)

    print("KERNEL_OK")
</pallas_src>

<mosaic_0001>
module attributes {stable_mosaic.version = 11 : i64} {
  func.func @_denoise_kernel(%arg0: i32, %arg1: memref<11x4x1xf32, #tpu.memory_space<vmem>>, %arg2: memref<1xf32, #tpu.memory_space<smem>>, %arg3: memref<4x1x256xf32, #tpu.memory_space<vmem>>, %arg4: memref<2x4x256xf32, #tpu.memory_space<vmem>>, %arg5: memref<2x4x256xf32, #tpu.memory_space<vmem>>) attributes {dimension_semantics = [#tpu.dimension_semantics<parallel>], iteration_bounds = array<i64: 1>, scalar_prefetch = 0 : i64, scratch_operands = 0 : i64, tpu.core_type = #tpu.core_type<tc>, window_params = [{transform_indices = @transform_0, window_bounds = array<i64: 11, 4, 1>}, {transform_indices = @transform_1, window_bounds = array<i64: 1>}, {pipeline_mode = #tpu.pipeline_mode<synchronous>, transform_indices = @transform_2, window_bounds = array<i64: 4, 1, 256>}, {transform_indices = @transform_3, window_bounds = array<i64: 2, 4, 256>}, {transform_indices = @transform_4, window_bounds = array<i64: 2, 4, 256>}]} {
    %c0 = arith.constant 0 : index
    %c0_0 = arith.constant 0 : index
    %c0_1 = arith.constant 0 : index
    %0 = vector.load %arg4[%c0, %c0_0, %c0_1] : memref<2x4x256xf32, #tpu.memory_space<vmem>>, vector<2x4x256xf32>
    %c0_2 = arith.constant 0 : index
    %c0_3 = arith.constant 0 : index
    %c0_4 = arith.constant 0 : index
    %1 = vector.load %arg1[%c0_2, %c0_3, %c0_4] : memref<11x4x1xf32, #tpu.memory_space<vmem>>, vector<11x4x1xf32>
    %c0_5 = arith.constant 0 : index
    %c0_6 = arith.constant 0 : index
    %c0_7 = arith.constant 0 : index
    %2 = vector.load %arg3[%c0_5, %c0_6, %c0_7] : memref<4x1x256xf32, #tpu.memory_space<vmem>>, vector<4x1x256xf32>
    %3 = vector.extract_strided_slice %2 {offsets = [0, 0, 0], sizes = [1, 1, 256], strides = [1, 1, 1]} : vector<4x1x256xf32> to vector<1x1x256xf32>
    %4 = vector.shape_cast %3 : vector<1x1x256xf32> to vector<1x256xf32>
    %5 = vector.extract_strided_slice %2 {offsets = [1, 0, 0], sizes = [1, 1, 256], strides = [1, 1, 1]} : vector<4x1x256xf32> to vector<1x1x256xf32>
    %6 = vector.shape_cast %5 : vector<1x1x256xf32> to vector<1x256xf32>
    %7 = vector.extract_strided_slice %2 {offsets = [2, 0, 0], sizes = [1, 1, 256], strides = [1, 1, 1]} : vector<4x1x256xf32> to vector<1x1x256xf32>
    %8 = vector.shape_cast %7 : vector<1x1x256xf32> to vector<1x256xf32>
    %9 = vector.extract_strided_slice %2 {offsets = [3, 0, 0], sizes = [1, 1, 256], strides = [1, 1, 1]} : vector<4x1x256xf32> to vector<1x1x256xf32>
    %10 = vector.shape_cast %9 : vector<1x1x256xf32> to vector<1x256xf32>
    %c1_i32 = arith.constant 1 : i32
    %11 = tpu.dynamic_rotate %0 by %c1_i32 dim 2 : vector<2x4x256xf32>, i32 -> vector<2x4x256xf32>
    %12 = vector.shape_cast %4 : vector<1x256xf32> to vector<1x1x256xf32>
    %13 = vector.broadcast %12 : vector<1x1x256xf32> to vector<2x4x256xf32>
    %14 = arith.mulf %13, %11 : vector<2x4x256xf32>
    %c255_i32 = arith.constant 255 : i32
    %15 = tpu.dynamic_rotate %0 by %c255_i32 dim 2 : vector<2x4x256xf32>, i32 -> vector<2x4x256xf32>
    %16 = vector.shape_cast %6 : vector<1x256xf32> to vector<1x1x256xf32>
    %17 = vector.broadcast %16 : vector<1x1x256xf32> to vector<2x4x256xf32>
    %18 = arith.mulf %17, %15 : vector<2x4x256xf32>
    %19 = vector.extract_strided_slice %1 {offsets = [0, 0, 0], sizes = [1, 4, 1], strides = [1, 1, 1]} : vector<11x4x1xf32> to vector<1x4x1xf32>
    %20 = vector.shape_cast %19 : vector<1x4x1xf32> to vector<4x1xf32>
    %21 = vector.shape_cast %20 : vector<4x1xf32> to vector<1x4x1xf32>
    %22 = vector.broadcast %21 : vector<1x4x1xf32> to vector<2x4x256xf32>
    %23 = arith.mulf %22, %14 : vector<2x4x256xf32>
    %24 = vector.extract_strided_slice %1 {offsets = [1, 0, 0], sizes = [1, 4, 1], strides = [1, 1, 1]} : vector<11x4x1xf32> to vector<1x4x1xf32>
    %25 = vector.shape_cast %24 : vector<1x4x1xf32> to vector<4x1xf32>
    %26 = vector.shape_cast %25 : vector<4x1xf32> to vector<1x4x1xf32>
    %27 = vector.broadcast %26 : vector<1x4x1xf32> to vector<2x4x256xf32>
    %28 = arith.mulf %27, %0 : vector<2x4x256xf32>
    %29 = arith.addf %23, %28 : vector<2x4x256xf32>
    %30 = vector.extract_strided_slice %1 {offsets = [2, 0, 0], sizes = [1, 4, 1], strides = [1, 1, 1]} : vector<11x4x1xf32> to vector<1x4x1xf32>
    %31 = vector.shape_cast %30 : vector<1x4x1xf32> to vector<4x1xf32>
    %32 = vector.shape_cast %31 : vector<4x1xf32> to vector<1x4x1xf32>
    %33 = vector.broadcast %32 : vector<1x4x1xf32> to vector<2x4x256xf32>
    %34 = arith.mulf %33, %18 : vector<2x4x256xf32>
    %35 = arith.addf %29, %34 : vector<2x4x256xf32>
    %36 = vector.extract_strided_slice %1 {offsets = [3, 0, 0], sizes = [1, 4, 1], strides = [1, 1, 1]} : vector<11x4x1xf32> to vector<1x4x1xf32>
    %37 = vector.shape_cast %36 : vector<1x4x1xf32> to vector<4x1xf32>
    %38 = vector.shape_cast %37 : vector<4x1xf32> to vector<1x4x1xf32>
    %39 = vector.broadcast %38 : vector<1x4x1xf32> to vector<2x4x256xf32>
    %40 = arith.mulf %39, %14 : vector<2x4x256xf32>
    %41 = vector.extract_strided_slice %1 {offsets = [4, 0, 0], sizes = [1, 4, 1], strides = [1, 1, 1]} : vector<11x4x1xf32> to vector<1x4x1xf32>
    %42 = vector.shape_cast %41 : vector<1x4x1xf32> to vector<4x1xf32>
    %43 = vector.shape_cast %42 : vector<4x1xf32> to vector<1x4x1xf32>
    %44 = vector.broadcast %43 : vector<1x4x1xf32> to vector<2x4x256xf32>
    %45 = arith.mulf %44, %0 : vector<2x4x256xf32>
    %46 = arith.addf %40, %45 : vector<2x4x256xf32>
    %47 = vector.extract_strided_slice %1 {offsets = [5, 0, 0], sizes = [1, 4, 1], strides = [1, 1, 1]} : vector<11x4x1xf32> to vector<1x4x1xf32>
    %48 = vector.shape_cast %47 : vector<1x4x1xf32> to vector<4x1xf32>
    %49 = vector.shape_cast %48 : vector<4x1xf32> to vector<1x4x1xf32>
    %50 = vector.broadcast %49 : vector<1x4x1xf32> to vector<2x4x256xf32>
    %51 = arith.mulf %50, %18 : vector<2x4x256xf32>
    %52 = arith.addf %46, %51 : vector<2x4x256xf32>
    %53 = vector.extract_strided_slice %1 {offsets = [6, 0, 0], sizes = [1, 4, 1], strides = [1, 1, 1]} : vector<11x4x1xf32> to vector<1x4x1xf32>
    %54 = vector.shape_cast %53 : vector<1x4x1xf32> to vector<4x1xf32>
    %55 = vector.shape_cast %54 : vector<4x1xf32> to vector<1x4x1xf32>
    %56 = vector.broadcast %55 : vector<1x4x1xf32> to vector<2x4x256xf32>
    %57 = arith.mulf %56, %14 : vector<2x4x256xf32>
    %58 = vector.extract_strided_slice %1 {offsets = [7, 0, 0], sizes = [1, 4, 1], strides = [1, 1, 1]} : vector<11x4x1xf32> to vector<1x4x1xf32>
    %59 = vector.shape_cast %58 : vector<1x4x1xf32> to vector<4x1xf32>
    %60 = vector.shape_cast %59 : vector<4x1xf32> to vector<1x4x1xf32>
    %61 = vector.broadcast %60 : vector<1x4x1xf32> to vector<2x4x256xf32>
    %62 = arith.mulf %61, %0 : vector<2x4x256xf32>
    %63 = arith.addf %57, %62 : vector<2x4x256xf32>
    %64 = vector.extract_strided_slice %1 {offsets = [8, 0, 0], sizes = [1, 4, 1], strides = [1, 1, 1]} : vector<11x4x1xf32> to vector<1x4x1xf32>
    %65 = vector.shape_cast %64 : vector<1x4x1xf32> to vector<4x1xf32>
    %66 = vector.shape_cast %65 : vector<4x1xf32> to vector<1x4x1xf32>
    %67 = vector.broadcast %66 : vector<1x4x1xf32> to vector<2x4x256xf32>
    %68 = arith.mulf %67, %18 : vector<2x4x256xf32>
    %69 = arith.addf %63, %68 : vector<2x4x256xf32>
    %c16_i32 = arith.constant 16 : i32
    %70 = tpu.dynamic_rotate %35 by %c16_i32 dim 2 : vector<2x4x256xf32>, i32 -> vector<2x4x256xf32>
    %71 = vector.shape_cast %8 : vector<1x256xf32> to vector<1x1x256xf32>
    %72 = vector.broadcast %71 : vector<1x1x256xf32> to vector<2x4x256xf32>
    %73 = arith.mulf %72, %70 : vector<2x4x256xf32>
    %74 = arith.addf %52, %73 : vector<2x4x256xf32>
    %c240_i32 = arith.constant 240 : i32
    %75 = tpu.dynamic_rotate %69 by %c240_i32 dim 2 : vector<2x4x256xf32>, i32 -> vector<2x4x256xf32>
    %76 = vector.shape_cast %10 : vector<1x256xf32> to vector<1x1x256xf32>
    %77 = vector.broadcast %76 : vector<1x1x256xf32> to vector<2x4x256xf32>
    %78 = arith.mulf %77, %75 : vector<2x4x256xf32>
    %79 = arith.addf %74, %78 : vector<2x4x256xf32>
    %cst = arith.constant dense<0.000000e+00> : vector<4x256xf32>
    %80 = vector.multi_reduction <add>, %79, %cst [0] : vector<2x4x256xf32> to vector<4x256xf32>
    %81 = vector.shape_cast %80 : vector<4x256xf32> to vector<1x4x256xf32>
    %cst_8 = arith.constant dense<0.000000e+00> : vector<1x4xf32>
    %82 = vector.multi_reduction <add>, %81, %cst_8 [2] : vector<1x4x256xf32> to vector<1x4xf32>
    %83 = vector.shape_cast %82 : vector<1x4xf32> to vector<1x4x1xf32>
    %cst_9 = arith.constant 0.001953125 : f32
    %84 = vector.broadcast %cst_9 : f32 to vector<1x4x1xf32>
    %85 = arith.mulf %83, %84 : vector<1x4x1xf32>
    %86 = vector.broadcast %85 : vector<1x4x1xf32> to vector<2x4x256xf32>
    %87 = arith.subf %79, %86 : vector<2x4x256xf32>
    %88 = arith.mulf %87, %87 : vector<2x4x256xf32>
    %cst_10 = arith.constant dense<0.000000e+00> : vector<4x256xf32>
    %89 = vector.multi_reduction <add>, %88, %cst_10 [0] : vector<2x4x256xf32> to vector<4x256xf32>
    %90 = vector.shape_cast %89 : vector<4x256xf32> to vector<1x4x256xf32>
    %cst_11 = arith.constant dense<0.000000e+00> : vector<1x4xf32>
    %91 = vector.multi_reduction <add>, %90, %cst_11 [2] : vector<1x4x256xf32> to vector<1x4xf32>
    %92 = vector.shape_cast %91 : vector<1x4xf32> to vector<1x4x1xf32>
    %cst_12 = arith.constant 0.001953125 : f32
    %93 = vector.broadcast %cst_12 : f32 to vector<1x4x1xf32>
    %94 = arith.mulf %92, %93 : vector<1x4x1xf32>
    %cst_13 = arith.constant 9.99999974E-6 : f32
    %95 = vector.broadcast %cst_13 : f32 to vector<1x4x1xf32>
    %96 = arith.addf %94, %95 : vector<1x4x1xf32>
    %97 = math.rsqrt %96 : vector<1x4x1xf32>
    %c0_14 = arith.constant 0 : index
    %98 = memref.load %arg2[%c0_14] : memref<1xf32, #tpu.memory_space<smem>>
    %cst_15 = arith.constant 1.000000e+00 : f32
    %99 = arith.subf %cst_15, %98 : f32
    %100 = vector.extract_strided_slice %1 {offsets = [9, 0, 0], sizes = [1, 4, 1], strides = [1, 1, 1]} : vector<11x4x1xf32> to vector<1x4x1xf32>
    %101 = vector.shape_cast %100 : vector<1x4x1xf32> to vector<4x1xf32>
    %102 = vector.broadcast %99 : f32 to vector<4x1xf32>
    %103 = arith.mulf %102, %101 : vector<4x1xf32>
    %104 = vector.shape_cast %103 : vector<4x1xf32> to vector<1x4x1xf32>
    %105 = arith.mulf %104, %97 : vector<1x4x1xf32>
    %106 = vector.broadcast %98 : f32 to vector<2x4x256xf32>
    %107 = arith.mulf %106, %0 : vector<2x4x256xf32>
    %108 = vector.broadcast %105 : vector<1x4x1xf32> to vector<2x4x256xf32>
    %109 = arith.mulf %108, %87 : vector<2x4x256xf32>
    %110 = arith.addf %107, %109 : vector<2x4x256xf32>
    %cst_16 = arith.constant 1.000000e+00 : f32
    %111 = arith.subf %cst_16, %98 : f32
    %112 = vector.extract_strided_slice %1 {offsets = [10, 0, 0], sizes = [1, 4, 1], strides = [1, 1, 1]} : vector<11x4x1xf32> to vector<1x4x1xf32>
    %113 = vector.shape_cast %112 : vector<1x4x1xf32> to vector<4x1xf32>
    %114 = vector.broadcast %111 : f32 to vector<4x1xf32>
    %115 = arith.mulf %114, %113 : vector<4x1xf32>
    %116 = vector.shape_cast %115 : vector<4x1xf32> to vector<1x4x1xf32>
    %117 = vector.broadcast %116 : vector<1x4x1xf32> to vector<2x4x256xf32>
    %118 = arith.addf %110, %117 : vector<2x4x256xf32>
    %c0_17 = arith.constant 0 : index
    %c0_18 = arith.constant 0 : index
    %c0_19 = arith.constant 0 : index
    %119 = vector.load %arg5[%c0_17, %c0_18, %c0_19] : memref<2x4x256xf32, #tpu.memory_space<vmem>>, vector<2x4x256xf32>
    tpu.vector_store %arg5[%c0_17, %c0_18, %c0_19], %118 {strides = array<i32>} : memref<2x4x256xf32, #tpu.memory_space<vmem>>, vector<2x4x256xf32>,
    return
  }
  func.func @transform_0(%arg0: i32) -> (i32, i32, i32) {
    %c0_i32 = arith.constant 0 : i32
    %c0_i32_0 = arith.constant 0 : i32
    %c0_i32_1 = arith.constant 0 : i32
    return %c0_i32, %arg0, %c0_i32_0 : i32, i32, i32
  }
  func.func @transform_1(%arg0: i32) -> i32 {
    %c0_i32 = arith.constant 0 : i32
    %c0_i32_0 = arith.constant 0 : i32
    return %c0_i32 : i32
  }
  func.func @transform_2(%arg0: i32) -> (i32, i32, i32) {
    %c0_i32 = arith.constant 0 : i32
    %c0_i32_0 = arith.constant 0 : i32
    %c0_i32_1 = arith.constant 0 : i32
    %c0_i32_2 = arith.constant 0 : i32
    return %c0_i32, %c0_i32_0, %c0_i32_1 : i32, i32, i32
  }
  func.func @transform_3(%arg0: i32) -> (i32, i32, i32) {
    %c0_i32 = arith.constant 0 : i32
    %c0_i32_0 = arith.constant 0 : i32
    %c0_i32_1 = arith.constant 0 : i32
    return %c0_i32, %arg0, %c0_i32_0 : i32, i32, i32
  }
  func.func @transform_4(%arg0: i32) -> (i32, i32, i32) {
    %c0_i32 = arith.constant 0 : i32
    %c0_i32_0 = arith.constant 0 : i32
    %c0_i32_1 = arith.constant 0 : i32
    return %c0_i32, %arg0, %c0_i32_0 : i32, i32, i32
  }
}

</mosaic_0001>

<llo_original>
// kernel: tpu_custom_call.1
$region0: #{tpu_custom_call.1}
  #allocation0 [shape = 'u32[]', space=smem, size = 0x4, offset = 0x4, fixed_abs, tag = 'smem constant byte address 0x4 - core index']
  #allocation1 [shape = 'u32[72,128]{1,0:T(1,128)}', space=vmem, size = 0x9000, scoped, tag = 'internal scratch']
  #allocation2 [shape = 'f32[1]{0:T(128)S(6)}', space=smem, size = 0x200, scoped, tag = 'scoped memory for tpu_custom_call.1']
  %s0 = inlined_call_operand.vmem [shape: f32[11,4,1], index: 0, kind: input, shape index: {}]
  %s1 = inlined_call_operand.<no memory space> [shape: f32[1], index: 1, kind: input, shape index: {}]
  %s2 = inlined_call_operand.vmem [shape: f32[4,1,256], index: 2, kind: input, shape index: {}]
  %s3 = inlined_call_operand.vmem [shape: f32[2,4,256], index: 3, kind: input, shape index: {}]
  %s4 = inlined_call_operand.hbm [shape: f32[2,4,256], index: 4, kind: output, shape index: {}]
  %s5 = sld [smem:[#allocation0]]
  $region26: #{tpu_custom_call.1} parent=0
    _
  %s7 = ssub.s32 1, %s5
  %s8 = scalar_select 0, %s7, %s5
  %9 = sst [smem:[#allocation2]] %s1
  $region1: #{tpu_custom_call.1} parent=0
    #allocation3 [shape = 'u8[8192]{0}', space=vmem, size = 0x2000, scoped, tag = 'output window, operand 0, single buffered']
    #allocation4 [shape = 's32[1]{0}', space=sflag, size = 0x4, scoped, tag = 'scoped memory for tpu_custom_call.1']
    %10 = vsyncpa [#allocation4], 0
    // Predicated region
    $region2: #{tpu_custom_call.1} parent=1 // pred_check
      _
    $region3: #{tpu_custom_call.1} parent=1 // pred_check_branch
      %12 = sbr.rel (0) target = $region5
    $region4: #{tpu_custom_call.1} parent=1 // pred_region
      _
    $region5: #{tpu_custom_call.1} parent=1 // pred_fallthru
      _
    // Predicated region
    $region6: #{tpu_custom_call.1} parent=1 // pred_check
      _
    $region7: #{tpu_custom_call.1} parent=1 // pred_check_branch
      %14 = sbr.rel (0) target = $region9
    $region8: #{tpu_custom_call.1} parent=1 // pred_region
      _
    $region9: #{tpu_custom_call.1} parent=1 // pred_fallthru
      _
    // Predicated region
    $region10: #{tpu_custom_call.1} parent=1 // pred_check
      _
    $region11: #{tpu_custom_call.1} parent=1 // pred_check_branch
      %16 = sbr.rel (0) target = $region13
    $region12: #{tpu_custom_call.1} parent=1 // pred_region
      _
    $region13: #{tpu_custom_call.1} parent=1 // pred_fallthru
      _
    // Predicated region
    $region14: #{tpu_custom_call.1} parent=1 // pred_check
      _
    $region15: #{tpu_custom_call.1} parent=1 // pred_check_branch
      %18 = sbr.rel (0) target = $region17
    $region16: #{tpu_custom_call.1} parent=1 // pred_region
      _
    $region17: #{tpu_custom_call.1} parent=1 // pred_fallthru
      _
    %v19 = vld [vmem:[%s3] sm:$0xff]
    %v20 = vld [vmem:[%s3 + $0x8] sm:$0xff]
    %v21 = vld [vmem:[%s0] sm:$0xf]
    %v22 = vld [vmem:[%s0 + $0x4] sm:$0xf]
    %v23 = vld [vmem:[%s0 + $0x8] sm:$0xf]
    %v24 = vld [vmem:[%s0 + $0xc] sm:$0xf]
    %v25 = vld [vmem:[%s0 + $0x10] sm:$0xf]
    %v26 = vld [vmem:[%s0 + $0x14] sm:$0xf]
    %v27 = vld [vmem:[%s0 + $0x18] sm:$0xf]
    %v28 = vld [vmem:[%s0 + $0x1c] sm:$0xf]
    %v29 = vld [vmem:[%s0 + $0x20] sm:$0xf]
    %v30 = vld [vmem:[%s0 + $0x24] sm:$0xf]
    %v31 = vld [vmem:[%s0 + $0x28] sm:$0xf]
    %v32 = vld [vmem:[%s2] sm:$0x3]
    %v33 = vld [vmem:[%s2 + $0x2] sm:$0x3]
    %v34 = vld [vmem:[%s2 + $0x4] sm:$0x3]
    %v35 = vld [vmem:[%s2 + $0x6] sm:$0x3]
    %38 = vst [vmem:[#allocation1] ss:$2 sm:$0xff] %v19
    %v39 = vld.sshfl [vmem:[#allocation1] sm:$0xff pattern:$0x75316420]
    %v40 = vld.sshfl [vmem:[#allocation1 + $0x8] sm:$0xff pattern:$0x75316420]
    %s41 = scalar_lea.vmem [#allocation1], 16
    %42 = vst [vmem:[%s41] ss:$2 sm:$0xff] %v20
    %v43 = vld.sshfl [vmem:[#allocation1 + $0x10] sm:$0xff pattern:$0x75316420]
    %v44 = vld.sshfl [vmem:[#allocation1 + $0x18] sm:$0xff pattern:$0x75316420]
    %49 = vrot.lane.b32.xlu0 %v39, 1
    %v50 = vpop.permute.xlu0 %49
    %51 = vrot.lane.b32.xlu0 %v43, 1
    %v52 = vpop.permute.xlu0 %51
    %53 = vrot.lane.b32.xlu0 %v40, 1
    %v54 = vpop.permute.xlu0 %53
    %55 = vrot.lane.b32.xlu0 %v44, 1
    %v56 = vpop.permute.xlu0 %55
    %v57 = vlaneseq
    %v58 = vand.u32 %v57, 127
    %vm59 = vcmp.lt.s32.totalorder %v58, 1
    %v60 = vsel %vm59, %v50, %v54
    %v61 = vsel %vm59, %v52, %v56
    %v62 = vsel %vm59, %v54, %v50
    %v63 = vsel %vm59, %v56, %v52
    %v65 = vperm.slane %v32, 0
    %v66 = vperm.slane %v32, 1
    %v69 = vmul.f32 %v65, %v62
    %v70 = vmul.f32 %v66, %v60
    %v71 = vmul.f32 %v65, %v63
    %v72 = vmul.f32 %v66, %v61
    %73 = vst [vmem:[#allocation1] ss:$2 sm:$0xff] %v19
    %v74 = vld.sshfl [vmem:[#allocation1] sm:$0xff pattern:$0x75316420]
    %v75 = vld.sshfl [vmem:[#allocation1 + $0x8] sm:$0xff pattern:$0x75316420]
    %s76 = scalar_lea.vmem [#allocation1], 16
    %77 = vst [vmem:[%s76] ss:$2 sm:$0xff] %v20
    %v78 = vld.sshfl [vmem:[#allocation1 + $0x10] sm:$0xff pattern:$0x75316420]
    %v79 = vld.sshfl [vmem:[#allocation1 + $0x18] sm:$0xff pattern:$0x75316420]
    %84 = vrot.lane.b32.xlu0 %v74, 127
    %v85 = vpop.permute.xlu0 %84
    %86 = vrot.lane.b32.xlu0 %v78, 127
    %v87 = vpop.permute.xlu0 %86
    %88 = vrot.lane.b32.xlu0 %v75, 127
    %v89 = vpop.permute.xlu0 %88
    %90 = vrot.lane.b32.xlu0 %v79, 127
    %v91 = vpop.permute.xlu0 %90
    %vm92 = vcmp.lt.s32.totalorder %v58, 127
    %v93 = vsel %vm92, %v85, %v89
    %v94 = vsel %vm92, %v87, %v91
    %v95 = vsel %vm92, %v89, %v85
    %v96 = vsel %vm92, %v91, %v87
    %v98 = vperm.slane %v33, 0
    %v99 = vperm.slane %v33, 1
    %v102 = vmul.f32 %v98, %v93
    %v103 = vmul.f32 %v99, %v95
    %v104 = vmul.f32 %v98, %v94
    %v105 = vmul.f32 %v99, %v96
    %107 = vset.pattern.permute.xlu0 0
    %108 = vperm.xlu0 %107, %v21
    %v109 = vpop.permute.xlu0 %108
    %v111 = vmul.f32 %v109, %v69
    %v112 = vmul.f32 %v109, %v70
    %v113 = vmul.f32 %v109, %v71
    %v114 = vmul.f32 %v109, %v72
    %116 = vset.pattern.permute.xlu0 0
    %117 = vperm.xlu0 %116, %v22
    %v118 = vpop.permute.xlu0 %117
    %120 = vst [vmem:[#allocation1] ss:$2 sm:$0xff] %v19
    %v121 = vld.sshfl [vmem:[#allocation1] sm:$0xff pattern:$0x75316420]
    %v122 = vld.sshfl [vmem:[#allocation1 + $0x8] sm:$0xff pattern:$0x75316420]
    %s123 = scalar_lea.vmem [#allocation1], 16
    %124 = vst [vmem:[%s123] ss:$2 sm:$0xff] %v20
    %v125 = vld.sshfl [vmem:[#allocation1 + $0x10] sm:$0xff pattern:$0x75316420]
    %v126 = vld.sshfl [vmem:[#allocation1 + $0x18] sm:$0xff pattern:$0x75316420]
    %v131 = vmul.f32 %v118, %v121
    %v132 = vmul.f32 %v118, %v122
    %v133 = vmul.f32 %v118, %v125
    %v134 = vmul.f32 %v118, %v126
    %v135 = vadd.f32 %v111, %v131
    %v136 = vadd.f32 %v112, %v132
    %v137 = vadd.f32 %v113, %v133
    %v138 = vadd.f32 %v114, %v134
    %140 = vset.pattern.permute.xlu0 0
    %141 = vperm.xlu0 %140, %v23
    %v142 = vpop.permute.xlu0 %141
    %v144 = vmul.f32 %v142, %v102
    %v145 = vmul.f32 %v142, %v103
    %v146 = vmul.f32 %v142, %v104
    %v147 = vmul.f32 %v142, %v105
    %v148 = vadd.f32 %v135, %v144
    %v149 = vadd.f32 %v136, %v145
    %v150 = vadd.f32 %v137, %v146
    %v151 = vadd.f32 %v138, %v147
    %153 = vset.pattern.permute.xlu0 0
    %154 = vperm.xlu0 %153, %v24
    %v155 = vpop.permute.xlu0 %154
    %v157 = vmul.f32 %v155, %v69
    %v158 = vmul.f32 %v155, %v70
    %v159 = vmul.f32 %v155, %v71
    %v160 = vmul.f32 %v155, %v72
    %162 = vset.pattern.permute.xlu0 0
    %163 = vperm.xlu0 %162, %v25
    %v164 = vpop.permute.xlu0 %163
    %166 = vst [vmem:[#allocation1] ss:$2 sm:$0xff] %v19
    %v167 = vld.sshfl [vmem:[#allocation1] sm:$0xff pattern:$0x75316420]
    %v168 = vld.sshfl [vmem:[#allocation1 + $0x8] sm:$0xff pattern:$0x75316420]
    %s169 = scalar_lea.vmem [#allocation1], 16
    %170 = vst [vmem:[%s169] ss:$2 sm:$0xff] %v20
    %v171 = vld.sshfl [vmem:[#allocation1 + $0x10] sm:$0xff pattern:$0x75316420]
    %v172 = vld.sshfl [vmem:[#allocation1 + $0x18] sm:$0xff pattern:$0x75316420]
    %v177 = vmul.f32 %v164, %v167
    %v178 = vmul.f32 %v164, %v168
    %v179 = vmul.f32 %v164, %v171
    %v180 = vmul.f32 %v164, %v172
    %v181 = vadd.f32 %v157, %v177
    %v182 = vadd.f32 %v158, %v178
    %v183 = vadd.f32 %v159, %v179
    %v184 = vadd.f32 %v160, %v180
    %186 = vset.pattern.permute.xlu0 0
    %187 = vperm.xlu0 %186, %v26
    %v188 = vpop.permute.xlu0 %187
    %v190 = vmul.f32 %v188, %v102
    %v191 = vmul.f32 %v188, %v103
    %v192 = vmul.f32 %v188, %v104
    %v193 = vmul.f32 %v188, %v105
    %v194 = vadd.f32 %v181, %v190
    %v195 = vadd.f32 %v182, %v191
    %v196 = vadd.f32 %v183, %v192
    %v197 = vadd.f32 %v184, %v193
    %199 = vset.pattern.permute.xlu0 0
    %200 = vperm.xlu0 %199, %v27
    %v201 = vpop.permute.xlu0 %200
    %v203 = vmul.f32 %v201, %v69
    %v204 = vmul.f32 %v201, %v70
    %v205 = vmul.f32 %v201, %v71
    %v206 = vmul.f32 %v201, %v72
    %208 = vset.pattern.permute.xlu0 0
    %209 = vperm.xlu0 %208, %v28
    %v210 = vpop.permute.xlu0 %209
    %212 = vst [vmem:[#allocation1] ss:$2 sm:$0xff] %v19
    %v213 = vld.sshfl [vmem:[#allocation1] sm:$0xff pattern:$0x75316420]
    %v214 = vld.sshfl [vmem:[#allocation1 + $0x8] sm:$0xff pattern:$0x75316420]
    %s215 = scalar_lea.vmem [#allocation1], 16
    %216 = vst [vmem:[%s215] ss:$2 sm:$0xff] %v20
    %v217 = vld.sshfl [vmem:[#allocation1 + $0x10] sm:$0xff pattern:$0x75316420]
    %v218 = vld.sshfl [vmem:[#allocation1 + $0x18] sm:$0xff pattern:$0x75316420]
    %v223 = vmul.f32 %v210, %v213
    %v224 = vmul.f32 %v210, %v214
    %v225 = vmul.f32 %v210, %v217
    %v226 = vmul.f32 %v210, %v218
    %v227 = vadd.f32 %v203, %v223
    %v228 = vadd.f32 %v204, %v224
    %v229 = vadd.f32 %v205, %v225
    %v230 = vadd.f32 %v206, %v226
    %232 = vset.pattern.permute.xlu0 0
    %233 = vperm.xlu0 %232, %v29
    %v234 = vpop.permute.xlu0 %233
    %v236 = vmul.f32 %v234, %v102
    %v237 = vmul.f32 %v234, %v103
    %v238 = vmul.f32 %v234, %v104
    %v239 = vmul.f32 %v234, %v105
    %v240 = vadd.f32 %v227, %v236
    %v241 = vadd.f32 %v228, %v237
    %v242 = vadd.f32 %v229, %v238
    %v243 = vadd.f32 %v230, %v239
    %244 = vrot.lane.b32.xlu0 %v148, 16
    %v245 = vpop.permute.xlu0 %244
    %246 = vrot.lane.b32.xlu0 %v150, 16
    %v247 = vpop.permute.xlu0 %246
    %248 = vrot.lane.b32.xlu0 %v149, 16
    %v249 = vpop.permute.xlu0 %248
    %250 = vrot.lane.b32.xlu0 %v151, 16
    %v251 = vpop.permute.xlu0 %250
    %vm252 = vcmp.lt.s32.totalorder %v58, 16
    %v253 = vsel %vm252, %v245, %v249
    %v254 = vsel %vm252, %v247, %v251
    %v255 = vsel %vm252, %v249, %v245
    %v256 = vsel %vm252, %v251, %v247
    %v258 = vperm.slane %v34, 0
    %v259 = vperm.slane %v34, 1
    %v262 = vmul.f32 %v258, %v255
    %v263 = vmul.f32 %v259, %v253
    %v264 = vmul.f32 %v258, %v256
    %v265 = vmul.f32 %v259, %v254
    %v266 = vadd.f32 %v194, %v262
    %v267 = vadd.f32 %v195, %v263
    %v268 = vadd.f32 %v196, %v264
    %v269 = vadd.f32 %v197, %v265
    %270 = vrot.lane.b32.xlu0 %v240, 112
    %v271 = vpop.permute.xlu0 %270
    %272 = vrot.lane.b32.xlu0 %v242, 112
    %v273 = vpop.permute.xlu0 %272
    %274 = vrot.lane.b32.xlu0 %v241, 112
    %v275 = vpop.permute.xlu0 %274
    %276 = vrot.lane.b32.xlu0 %v243, 112
    %v277 = vpop.permute.xlu0 %276
    %vm278 = vcmp.lt.s32.totalorder %v58, 112
    %v279 = vsel %vm278, %v271, %v275
    %v280 = vsel %vm278, %v273, %v277
    %v281 = vsel %vm278, %v275, %v271
    %v282 = vsel %vm278, %v277, %v273
    %v284 = vperm.slane %v35, 0
    %v285 = vperm.slane %v35, 1
    %v288 = vmul.f32 %v284, %v279
    %v289 = vmul.f32 %v285, %v281
    %v290 = vmul.f32 %v284, %v280
    %v291 = vmul.f32 %v285, %v282
    %v292 = vadd.f32 %v266, %v288
    %v293 = vadd.f32 %v267, %v289
    %v294 = vadd.f32 %v268, %v290
    %v295 = vadd.f32 %v269, %v291
    %vm296 = vcmask 1043456
    %v297 = vsel %vm296, %v292, 0.0
    %v298 = vsel %vm296, %v294, 0.0
    %v299 = vadd.f32 %v297, %v298
    %v300 = vsel %vm296, %v293, 0.0
    %v301 = vsel %vm296, %v295, 0.0
    %v302 = vadd.f32 %v300, %v301
    %v303 = vsel %vm296, %v299, 0.0
    %v304 = vsel %vm296, %v302, 0.0
    %v305 = vadd.f32 %v303, %v304
    %306 = vadd.xlane.f32.xlu0 %v305
    %v307 = vpop.xlane.xlu0 %306
    %v308 = vmul.f32 %v307, 0.001953125
    %v309 = vsub.f32 %v292, %v308
    %v310 = vsub.f32 %v293, %v308
    %v311 = vsub.f32 %v294, %v308
    %v312 = vsub.f32 %v295, %v308
    %v313 = vmul.f32 %v309, %v309
    %v314 = vmul.f32 %v310, %v310
    %v315 = vmul.f32 %v311, %v311
    %v316 = vmul.f32 %v312, %v312
    %v317 = vsel %vm296, %v313, 0.0
    %v318 = vsel %vm296, %v315, 0.0
    %v319 = vadd.f32 %v317, %v318
    %v320 = vsel %vm296, %v314, 0.0
    %v321 = vsel %vm296, %v316, 0.0
    %v322 = vadd.f32 %v320, %v321
    %v323 = vsel %vm296, %v319, 0.0
    %v324 = vsel %vm296, %v322, 0.0
    %v325 = vadd.f32 %v323, %v324
    %326 = vadd.xlane.f32.xlu0 %v325
    %v327 = vpop.xlane.xlu0 %326
    %v328 = vmul.f32 %v327, 0.001953125
    %v329 = vadd.f32 %v328, 1e-05
    %v330 = vrsqrt.pop %v329
    %v331 = vmul.f32 %v330, %v329
    %v332 = vmul.f32 %v331, %v330
    %v333 = vmul.f32 0.5, %v332
    %v334 = vsub.f32 1.5, %v333
    %v335 = vmul.f32 %v330, %v334
    %vm336 = vweird.f32 %v329
    %vm337 = vweird.f32 %v330
    %vm338 = vmor %vm336, %vm337
    %v339 = vsel %vm338, %v330, %v335
    %s340 = sld [smem:[#allocation2]]
    %s341 = ssub.f32 1.0, %s340
    %v342 = vstv %s341
    %v343 = vmul.f32 %v342, %v30
    %v344 = vmul.f32 %v343, %v339
    %v345 = vstv %s340
    %v346 = vmul.f32 %v345, %v19
    %v347 = vmul.f32 %v345, %v20
    %349 = vset.pattern.permute.xlu0 0
    %350 = vperm.xlu0 %349, %v344
    %v351 = vpop.permute.xlu0 %350
    %v353 = vmul.f32 %v351, %v309
    %v354 = vmul.f32 %v351, %v310
    %v355 = vmul.f32 %v351, %v311
    %v356 = vmul.f32 %v351, %v312
    %v361 = vrot.slane %v354, 4
    %v362 = vrot.slane %v356, 4
    %v363 = vsel %vm296, %v353, %v361
    %v364 = vsel %vm296, %v355, %v362
    %v367 = vadd.f32 %v346, %v363
    %v368 = vadd.f32 %v347, %v364
    %v369 = vmul.f32 %v342, %v31
    %371 = vset.pattern.permute.xlu0 0
    %372 = vperm.xlu0 %371, %v369
    %v373 = vpop.permute.xlu0 %372
    %v375 = vunpack.c.l.s4 839922192
    %v376 = vunpack.c.0.s8 %v375
    %v377 = vperm.slane %v373, %v376
    %v379 = vadd.f32 %v367, %v377
    %v380 = vadd.f32 %v368, %v377
    %381 = vst [vmem:[#allocation3] sm:$0xff] %v379
    %382 = vst [vmem:[#allocation3 + $0x8] sm:$0xff] %v380
    // Predicated region
    $region18: #{tpu_custom_call.1} parent=1 // pred_check
      _
    $region19: #{tpu_custom_call.1} parent=1 // pred_check_branch
      %384 = sbr.rel (0) target = $region21
    $region20: #{tpu_custom_call.1} parent=1 // pred_region
      %386 = vsyncadd [#allocation4], 0
      %s387 = sshll.u32 [#allocation3], 4
      %s388 = int_to_ptr.vmem [resolvable:$true] %s387
      %s389 = sshll.u32 %s4, 4
      %s390 = int_to_ptr.hbm [resolvable:$true] %s389
      %395 = dma.vmem_to_hbm [thread:$0]  %s388, 256, %s390, [#allocation4], 128, 128, 8
    $region21: #{tpu_custom_call.1} parent=1 // pred_fallthru
      _
    // Predicated region
    $region22: #{tpu_custom_call.1} parent=1 // pred_check
      _
    $region23: #{tpu_custom_call.1} parent=1 // pred_check_branch
      %397 = sbr.rel (0) target = $region25
    $region24: #{tpu_custom_call.1} parent=1 // pred_region
      %399 = dma.done [#allocation4], 256
    $region25: #{tpu_custom_call.1} parent=1 // pred_fallthru
      _
    %400 = vsyncpa [#allocation4], 1

</llo_original>
